<compile_context>
chip_gen: v5e
topology: v5e:2x2
jax: 0.10.0
libtpu: 0.0.40
codegen_flags: <defaults>
</compile_context>

<pallas_src>
import functools
import math

import jax
import jax.numpy as jnp
from jax.experimental import pallas as pl
from jax.experimental.pallas import tpu as pltpu

LEAKY_SLOPE = 0.01   # PyTorch nn.LeakyReLU default negative_slope
LANE = 128           # TPU vreg lane width
SUBLANE = 8


def _round_up(n: int, m: int) -> int:
    return ((n + m - 1) // m) * m


def _policy_kernel(x_ref,
                   w1_ref, b1_ref,
                   w2_ref, b2_ref,
                   wh_ref, bh_ref,
                   mean_ref, std_ref,
                   *, out_pad, log_std_min, log_std_max):
    """Fused MLP forward for one batch tile.

    trunk : LeakyReLU(x @ w1 + b1) -> LeakyReLU(. @ w2 + b2)
    heads : one fused matmul [hidden_pad, 2*out_pad]; first half = mean,
            second half = log_std -> clip -> exp = std.
    Matmul operands are in the packed compute dtype (bf16 by default);
    accumulation and all elementwise math stay f32.
    """
    cdt = w1_ref.dtype
    x = x_ref[...]

    # shared[0]: Linear + LeakyReLU (f32 accumulation, f32 elementwise)
    h = jnp.dot(x, w1_ref[...], preferred_element_type=jnp.float32) + b1_ref[...]
    h = jnp.where(h > 0, h, LEAKY_SLOPE * h)

    # shared[2]: Linear + LeakyReLU
    h = jnp.dot(h.astype(cdt), w2_ref[...],
                preferred_element_type=jnp.float32) + b2_ref[...]
    h = jnp.where(h > 0, h, LEAKY_SLOPE * h)

    # fused heads: [TB, 2*out_pad]
    heads = jnp.dot(h.astype(cdt), wh_ref[...],
                    preferred_element_type=jnp.float32) + bh_ref[...]

    mean_ref[...] = heads[:, :out_pad].astype(mean_ref.dtype)
    log_std = jnp.clip(heads[:, out_pad:], log_std_min, log_std_max)
    std_ref[...] = jnp.exp(log_std).astype(std_ref.dtype)


def init_raw_params(key, in_features, out_features, hidden_size):
    """Xavier-normal weights ([fan_in, fan_out] layout), zero biases — matches
    the PyTorch module's __init__ (weights are the transpose of torch's [out, in])."""
    def xavier_normal(k, fan_in, fan_out):
        std = math.sqrt(2.0 / (fan_in + fan_out))
        return std * jax.random.normal(k, (fan_in, fan_out), dtype=jnp.float32)

    k1, k2, k3, k4 = jax.random.split(key, 4)
    return {
        "w1": xavier_normal(k1, in_features, hidden_size),
        "b1": jnp.zeros((hidden_size,), jnp.float32),
        "w2": xavier_normal(k2, hidden_size, hidden_size),
        "b2": jnp.zeros((hidden_size,), jnp.float32),
        "wm": xavier_normal(k3, hidden_size, out_features),
        "bm": jnp.zeros((out_features,), jnp.float32),
        "ws": xavier_normal(k4, hidden_size, out_features),
        "bs": jnp.zeros((out_features,), jnp.float32),
    }


def pack_params(raw, hidden_pad, out_pad, compute_dtype):
    """Zero-pad hidden/out dims to full 128-lane width, fuse the two heads into
    a single [hidden_pad, 2*out_pad] weight, cast matmul weights to compute dtype.
    Padding with exact zeros is mathematically identical to the unpadded net."""
    in_features = raw["w1"].shape[0]

    def pad2(w, rows, cols):
        return jnp.pad(w, ((0, rows - w.shape[0]), (0, cols - w.shape[1])))

    def pad_bias(b, n):
        return jnp.pad(b, (0, n - b.shape[0])).reshape(1, n).astype(jnp.float32)

    w1 = pad2(raw["w1"], in_features, hidden_pad).astype(compute_dtype)
    w2 = pad2(raw["w2"], hidden_pad, hidden_pad).astype(compute_dtype)
    wh = jnp.concatenate(
        [pad2(raw["wm"], hidden_pad, out_pad), pad2(raw["ws"], hidden_pad, out_pad)],
        axis=1).astype(compute_dtype)

    b1 = pad_bias(raw["b1"], hidden_pad)
    b2 = pad_bias(raw["b2"], hidden_pad)
    bh = jnp.concatenate([pad_bias(raw["bm"], out_pad),
                          pad_bias(raw["bs"], out_pad)], axis=1)
    return w1, b1, w2, b2, wh, bh


def continuous_policy_forward(x, raw_params, log_std_min, log_std_max, *,
                              batch_tile=512, compute_dtype=jnp.bfloat16):
    """Run the fused policy-network forward pass on TPU via Pallas.

    x: [B, in_features] float32
    raw_params: dict from init_raw_params (unpadded, [fan_in, fan_out] layout)
    returns: (mean [B, out_features], std [B, out_features]) in float32
    """
    B, in_features = x.shape
    out_features = raw_params["wm"].shape[1]

    hidden_pad = _round_up(raw_params["w1"].shape[1], LANE)
    out_pad = _round_up(out_features, LANE)
    out2 = 2 * out_pad

    w1, b1, w2, b2, wh, bh = pack_params(raw_params, hidden_pad, out_pad, compute_dtype)

    # Batch tile: aligned to the packed-sublane granularity of the compute dtype
    # (8 rows for f32, 16 for bf16), no bigger than needed for this batch.
    cbytes = jnp.dtype(compute_dtype).itemsize
    row_align = SUBLANE * max(1, 4 // cbytes)
    tb = max(row_align, min(int(batch_tile), _round_up(B, row_align)))
    tb = _round_up(tb, row_align)
    grid = (pl.cdiv(B, tb),)

    # Explicit VMEM budget (resident weights + double-buffered streamed tiles +
    # in-flight f32 activations), with 2x headroom, capped at 32 MiB scoped
    # (safe on v7x's 64 MiB physical VMEM).
    resident = (in_features * hidden_pad + hidden_pad * hidden_pad
                + hidden_pad * out2) * cbytes + (2 * hidden_pad + out2) * 4
    streamed = 2 * tb * in_features * cbytes + 2 * 2 * tb * out_pad * 4
    temps = 2 * tb * hidden_pad * 4 + tb * out2 * 4
    vmem_limit = int(min(32 << 20, max(4 << 20, 2 * (resident + streamed + temps))))

    kernel = functools.partial(_policy_kernel,
                               out_pad=out_pad,
                               log_std_min=float(log_std_min),
                               log_std_max=float(log_std_max))

    def resident_spec(shape):
        # Constant index map -> DMA'd once, stays VMEM-resident across the grid.
        return pl.BlockSpec(shape, lambda i: (0, 0))

    mean_pad, std_pad = pl.pallas_call(
        kernel,
        out_shape=(
            jax.ShapeDtypeStruct((B, out_pad), jnp.float32),
            jax.ShapeDtypeStruct((B, out_pad), jnp.float32),
        ),
        grid=grid,
        in_specs=[
            pl.BlockSpec((tb, in_features), lambda i: (i, 0)),   # x: streamed per tile
            resident_spec((in_features, hidden_pad)),            # w1
            resident_spec((1, hidden_pad)),                      # b1
            resident_spec((hidden_pad, hidden_pad)),             # w2
            resident_spec((1, hidden_pad)),                      # b2
            resident_spec((hidden_pad, out2)),                   # wh (fused heads)
            resident_spec((1, out2)),                            # bh
        ],
        out_specs=(
            pl.BlockSpec((tb, out_pad), lambda i: (i, 0)),       # mean (lane-dense)
            pl.BlockSpec((tb, out_pad), lambda i: (i, 0)),       # std  (lane-dense)
        ),
        compiler_params=pltpu.CompilerParams(
            dimension_semantics=("parallel",),
            vmem_limit_bytes=vmem_limit,
        ),
    )(x.astype(compute_dtype), w1, b1, w2, b2, wh, bh)

    # Strip lane padding outside the kernel.
    return mean_pad[:, :out_features], std_pad[:, :out_features]


def reference_forward(x, raw, log_std_min, log_std_max, compute_dtype=jnp.bfloat16):
    """Pure-JAX reference with the same bf16-operand / f32-accumulation math."""
    cdt = compute_dtype

    def dot(a, w):
        return jnp.dot(a.astype(cdt), w.astype(cdt), preferred_element_type=jnp.float32)

    h = dot(x, raw["w1"]) + raw["b1"]
    h = jnp.where(h > 0, h, LEAKY_SLOPE * h)
    h = dot(h, raw["w2"]) + raw["b2"]
    h = jnp.where(h > 0, h, LEAKY_SLOPE * h)
    mean = dot(h, raw["wm"]) + raw["bm"]
    log_std = jnp.clip(dot(h, raw["ws"]) + raw["bs"], log_std_min, log_std_max)
    return mean, jnp.exp(log_std)


if __name__ == "__main__":
    # Small shapes consistent with the module's forward.
    in_features, out_features, hidden_size = 16, 8, 32
    log_std_min, log_std_max = -20.0, 2.0

    key = jax.random.PRNGKey(0)
    k_params, k_x1, k_x2 = jax.random.split(key, 3)
    raw = init_raw_params(k_params, in_features, out_features, hidden_size)

    # Case 1: tiny batch (single grid step).
    x_small = jax.random.normal(k_x1, (8, in_features), dtype=jnp.float32)
    mean, std = continuous_policy_forward(x_small, raw, log_std_min, log_std_max)
    jax.block_until_ready((mean, std))
    m_ref, s_ref = reference_forward(x_small, raw, log_std_min, log_std_max)
    assert mean.shape == (8, out_features) and std.shape == (8, out_features)
    assert jnp.allclose(mean, m_ref, atol=1e-3, rtol=1e-3)
    assert jnp.allclose(std, s_ref, atol=1e-3, rtol=1e-3)
    assert bool(jnp.all(std > 0))

    # Case 2: multi-tile grid with an uneven last tile (exercises batch tiling).
    x_big = jax.random.normal(k_x2, (300, in_features), dtype=jnp.float32)
    mean_b, std_b = continuous_policy_forward(x_big, raw, log_std_min, log_std_max,
                                              batch_tile=128)
    jax.block_until_ready((mean_b, std_b))
    mb_ref, sb_ref = reference_forward(x_big, raw, log_std_min, log_std_max)
    assert mean_b.shape == (300, out_features) and std_b.shape == (300, out_features)
    assert jnp.allclose(mean_b, mb_ref, atol=1e-3, rtol=1e-3)
    assert jnp.allclose(std_b, sb_ref, atol=1e-3, rtol=1e-3)

    print("KERNEL_OK")
</pallas_src>

<mosaic_0001>
module attributes {stable_mosaic.version = 11 : i64} {
  func.func @_policy_kernel(%arg0: i32, %arg1: memref<16x16xbf16, #tpu.memory_space<vmem>>, %arg2: memref<16x128xbf16, #tpu.memory_space<vmem>>, %arg3: memref<1x128xf32, #tpu.memory_space<vmem>>, %arg4: memref<128x128xbf16, #tpu.memory_space<vmem>>, %arg5: memref<1x128xf32, #tpu.memory_space<vmem>>, %arg6: memref<128x256xbf16, #tpu.memory_space<vmem>>, %arg7: memref<1x256xf32, #tpu.memory_space<vmem>>, %arg8: memref<16x128xf32, #tpu.memory_space<vmem>>, %arg9: memref<16x128xf32, #tpu.memory_space<vmem>>) attributes {dimension_semantics = [#tpu.dimension_semantics<parallel>], iteration_bounds = array<i64: 1>, scalar_prefetch = 0 : i64, scratch_operands = 0 : i64, tpu.core_type = #tpu.core_type<tc>, window_params = [{transform_indices = @transform_0, window_bounds = array<i64: 16, 16>}, {pipeline_mode = #tpu.pipeline_mode<synchronous>, transform_indices = @transform_1, window_bounds = array<i64: 16, 128>}, {pipeline_mode = #tpu.pipeline_mode<synchronous>, transform_indices = @transform_2, window_bounds = array<i64: 1, 128>}, {pipeline_mode = #tpu.pipeline_mode<synchronous>, transform_indices = @transform_3, window_bounds = array<i64: 128, 128>}, {pipeline_mode = #tpu.pipeline_mode<synchronous>, transform_indices = @transform_4, window_bounds = array<i64: 1, 128>}, {pipeline_mode = #tpu.pipeline_mode<synchronous>, transform_indices = @transform_5, window_bounds = array<i64: 128, 256>}, {pipeline_mode = #tpu.pipeline_mode<synchronous>, transform_indices = @transform_6, window_bounds = array<i64: 1, 256>}, {transform_indices = @transform_7, window_bounds = array<i64: 16, 128>}, {transform_indices = @transform_8, window_bounds = array<i64: 16, 128>}]} {
    %c0 = arith.constant 0 : index
    %c0_0 = arith.constant 0 : index
    %0 = vector.load %arg1[%c0, %c0_0] : memref<16x16xbf16, #tpu.memory_space<vmem>>, vector<16x16xbf16>
    %c0_1 = arith.constant 0 : index
    %c0_2 = arith.constant 0 : index
    %1 = vector.load %arg2[%c0_1, %c0_2] : memref<16x128xbf16, #tpu.memory_space<vmem>>, vector<16x128xbf16>
    %cst = arith.constant dense<0.000000e+00> : vector<16x128xf32>
    %2 = tpu.matmul %0, %1, %cst {dimension_numbers = #tpu.dot_dimension_numbers<[1], [0], [0], [1], [0, 0, 1, 1], [], []>} : vector<16x16xbf16>, vector<16x128xbf16>, vector<16x128xf32> -> vector<16x128xf32>
    %c0_3 = arith.constant 0 : index
    %c0_4 = arith.constant 0 : index
    %3 = vector.load %arg3[%c0_3, %c0_4] : memref<1x128xf32, #tpu.memory_space<vmem>>, vector<1x128xf32>
    %4 = vector.broadcast %3 : vector<1x128xf32> to vector<16x128xf32>
    %5 = arith.addf %2, %4 : vector<16x128xf32>
    %cst_5 = arith.constant 0.000000e+00 : f32
    %6 = vector.broadcast %cst_5 : f32 to vector<16x128xf32>
    %7 = arith.cmpf ogt, %5, %6 : vector<16x128xf32>
    %cst_6 = arith.constant 0.00999999977 : f32
    %8 = vector.broadcast %cst_6 : f32 to vector<16x128xf32>
    %9 = arith.mulf %8, %5 : vector<16x128xf32>
    %10 = arith.select %7, %5, %9 : vector<16x128xi1>, vector<16x128xf32>
    %11 = arith.truncf %10 : vector<16x128xf32> to vector<16x128xbf16>
    %c0_7 = arith.constant 0 : index
    %c0_8 = arith.constant 0 : index
    %12 = vector.load %arg4[%c0_7, %c0_8] : memref<128x128xbf16, #tpu.memory_space<vmem>>, vector<128x128xbf16>
    %cst_9 = arith.constant dense<0.000000e+00> : vector<16x128xf32>
    %13 = tpu.matmul %11, %12, %cst_9 {dimension_numbers = #tpu.dot_dimension_numbers<[1], [0], [0], [1], [0, 0, 1, 1], [], []>} : vector<16x128xbf16>, vector<128x128xbf16>, vector<16x128xf32> -> vector<16x128xf32>
    %c0_10 = arith.constant 0 : index
    %c0_11 = arith.constant 0 : index
    %14 = vector.load %arg5[%c0_10, %c0_11] : memref<1x128xf32, #tpu.memory_space<vmem>>, vector<1x128xf32>
    %15 = vector.broadcast %14 : vector<1x128xf32> to vector<16x128xf32>
    %16 = arith.addf %13, %15 : vector<16x128xf32>
    %cst_12 = arith.constant 0.000000e+00 : f32
    %17 = vector.broadcast %cst_12 : f32 to vector<16x128xf32>
    %18 = arith.cmpf ogt, %16, %17 : vector<16x128xf32>
    %cst_13 = arith.constant 0.00999999977 : f32
    %19 = vector.broadcast %cst_13 : f32 to vector<16x128xf32>
    %20 = arith.mulf %19, %16 : vector<16x128xf32>
    %21 = arith.select %18, %16, %20 : vector<16x128xi1>, vector<16x128xf32>
    %22 = arith.truncf %21 : vector<16x128xf32> to vector<16x128xbf16>
    %c0_14 = arith.constant 0 : index
    %c0_15 = arith.constant 0 : index
    %23 = vector.load %arg6[%c0_14, %c0_15] : memref<128x256xbf16, #tpu.memory_space<vmem>>, vector<128x256xbf16>
    %cst_16 = arith.constant dense<0.000000e+00> : vector<16x256xf32>
    %24 = tpu.matmul %22, %23, %cst_16 {dimension_numbers = #tpu.dot_dimension_numbers<[1], [0], [0], [1], [0, 0, 1, 1], [], []>} : vector<16x128xbf16>, vector<128x256xbf16>, vector<16x256xf32> -> vector<16x256xf32>
    %c0_17 = arith.constant 0 : index
    %c0_18 = arith.constant 0 : index
    %25 = vector.load %arg7[%c0_17, %c0_18] : memref<1x256xf32, #tpu.memory_space<vmem>>, vector<1x256xf32>
    %26 = vector.broadcast %25 : vector<1x256xf32> to vector<16x256xf32>
    %27 = arith.addf %24, %26 : vector<16x256xf32>
    %28 = vector.extract_strided_slice %27 {offsets = [0, 0], sizes = [16, 128], strides = [1, 1]} : vector<16x256xf32> to vector<16x128xf32>
    %c0_19 = arith.constant 0 : index
    %c0_20 = arith.constant 0 : index
    %29 = vector.load %arg8[%c0_19, %c0_20] : memref<16x128xf32, #tpu.memory_space<vmem>>, vector<16x128xf32>
    tpu.vector_store %arg8[%c0_19, %c0_20], %28 {strides = array<i32>} : memref<16x128xf32, #tpu.memory_space<vmem>>, vector<16x128xf32>,
    %30 = vector.extract_strided_slice %27 {offsets = [0, 128], sizes = [16, 128], strides = [1, 1]} : vector<16x256xf32> to vector<16x128xf32>
    %cst_21 = arith.constant -2.000000e+01 : f32
    %cst_22 = arith.constant 2.000000e+00 : f32
    %31 = vector.broadcast %cst_21 : f32 to vector<16x128xf32>
    %32 = arith.maximumf %31, %30 : vector<16x128xf32>
    %33 = vector.broadcast %cst_22 : f32 to vector<16x128xf32>
    %34 = arith.minimumf %33, %32 : vector<16x128xf32>
    %35 = math.exp %34 : vector<16x128xf32>
    %c0_23 = arith.constant 0 : index
    %c0_24 = arith.constant 0 : index
    %36 = vector.load %arg9[%c0_23, %c0_24] : memref<16x128xf32, #tpu.memory_space<vmem>>, vector<16x128xf32>
    tpu.vector_store %arg9[%c0_23, %c0_24], %35 {strides = array<i32>} : memref<16x128xf32, #tpu.memory_space<vmem>>, vector<16x128xf32>,
    return
  }
  func.func @transform_0(%arg0: i32) -> (i32, i32) {
    %c0_i32 = arith.constant 0 : i32
    %c0_i32_0 = arith.constant 0 : i32
    return %arg0, %c0_i32 : i32, i32
  }
  func.func @transform_1(%arg0: i32) -> (i32, i32) {
    %c0_i32 = arith.constant 0 : i32
    %c0_i32_0 = arith.constant 0 : i32
    %c0_i32_1 = arith.constant 0 : i32
    return %c0_i32, %c0_i32_0 : i32, i32
  }
  func.func @transform_2(%arg0: i32) -> (i32, i32) {
    %c0_i32 = arith.constant 0 : i32
    %c0_i32_0 = arith.constant 0 : i32
    %c0_i32_1 = arith.constant 0 : i32
    return %c0_i32, %c0_i32_0 : i32, i32
  }
  func.func @transform_3(%arg0: i32) -> (i32, i32) {
    %c0_i32 = arith.constant 0 : i32
    %c0_i32_0 = arith.constant 0 : i32
    %c0_i32_1 = arith.constant 0 : i32
    return %c0_i32, %c0_i32_0 : i32, i32
  }
  func.func @transform_4(%arg0: i32) -> (i32, i32) {
    %c0_i32 = arith.constant 0 : i32
    %c0_i32_0 = arith.constant 0 : i32
    %c0_i32_1 = arith.constant 0 : i32
    return %c0_i32, %c0_i32_0 : i32, i32
  }
  func.func @transform_5(%arg0: i32) -> (i32, i32) {
    %c0_i32 = arith.constant 0 : i32
    %c0_i32_0 = arith.constant 0 : i32
    %c0_i32_1 = arith.constant 0 : i32
    return %c0_i32, %c0_i32_0 : i32, i32
  }
  func.func @transform_6(%arg0: i32) -> (i32, i32) {
    %c0_i32 = arith.constant 0 : i32
    %c0_i32_0 = arith.constant 0 : i32
    %c0_i32_1 = arith.constant 0 : i32
    return %c0_i32, %c0_i32_0 : i32, i32
  }
  func.func @transform_7(%arg0: i32) -> (i32, i32) {
    %c0_i32 = arith.constant 0 : i32
    %c0_i32_0 = arith.constant 0 : i32
    return %arg0, %c0_i32 : i32, i32
  }
  func.func @transform_8(%arg0: i32) -> (i32, i32) {
    %c0_i32 = arith.constant 0 : i32
    %c0_i32_0 = arith.constant 0 : i32
    return %arg0, %c0_i32 : i32, i32
  }
}

</mosaic_0001>

<llo_original>
// kernel: tpu_custom_call.1
$region0: #{tpu_custom_call.1}
  #allocation0 [shape = 'u32[]', space=smem, size = 0x4, offset = 0x4, fixed_abs, tag = 'smem constant byte address 0x4 - core index']
  #allocation1 [shape = 'u32[72,128]{1,0:T(1,128)}', space=vmem, size = 0x9000, scoped, tag = 'internal scratch']
  %s0 = inlined_call_operand.hbm [shape: bf16[8,16], index: 0, kind: input, shape index: {}]
  %s1 = inlined_call_operand.hbm [shape: bf16[16,128], index: 1, kind: input, shape index: {}]
  %s2 = inlined_call_operand.vmem [shape: f32[1,128], index: 2, kind: input, shape index: {}]
  %s3 = inlined_call_operand.hbm [shape: bf16[128,128], index: 3, kind: input, shape index: {}]
  %s4 = inlined_call_operand.hbm [shape: f32[1,128], index: 4, kind: input, shape index: {}]
  %s5 = inlined_call_operand.hbm [shape: bf16[128,256], index: 5, kind: input, shape index: {}]
  %s6 = inlined_call_operand.vmem [shape: f32[1,256], index: 6, kind: input, shape index: {}]
  %s7 = inlined_call_operand.hbm [shape: f32[8,128], index: 7, kind: output, shape index: {0}]
  %s8 = inlined_call_operand.hbm [shape: f32[8,128], index: 8, kind: output, shape index: {1}]
  %9 = xla_tuple %s7, %s8
  %s10 = sld [smem:[#allocation0]]
  $region66: #{tpu_custom_call.1} parent=0
    _
  %s12 = ssub.s32 1, %s10
  %s13 = scalar_select 0, %s12, %s10
  $region1: #{tpu_custom_call.1} parent=0
    #allocation2 [shape = 'u8[4096]{0}', space=vmem, size = 0x1000, scoped, tag = 'input window, operand 0, single buffered']
    #allocation3 [shape = 's32[1]{0}', space=sflag, size = 0x4, scoped, tag = 'scoped memory for tpu_custom_call.1']
    #allocation4 [shape = 's32[1]{0}', space=sflag, size = 0x4, scoped, tag = 'scoped memory for tpu_custom_call.1']
    #allocation5 [shape = 'u8[4096]{0}', space=vmem, size = 0x1000, scoped, tag = 'input window, operand 1, single buffered']
    #allocation6 [shape = 's32[1]{0}', space=sflag, size = 0x4, scoped, tag = 'scoped memory for tpu_custom_call.1']
    #allocation7 [shape = 'u8[32768]{0}', space=vmem, size = 0x8000, scoped, tag = 'input window, operand 3, single buffered']
    #allocation8 [shape = 'u8[512]{0}', space=vmem, size = 0x400, scoped, tag = 'input window, operand 4, single buffered']
    #allocation9 [shape = 's32[1]{0}', space=sflag, size = 0x4, scoped, tag = 'scoped memory for tpu_custom_call.1']
    #allocation10 [shape = 'u8[65536]{0}', space=vmem, size = 0x10000, scoped, tag = 'input window, operand 5, single buffered']
    #allocation11 [shape = 'u8[8192]{0}', space=vmem, size = 0x2000, scoped, tag = 'output window, operand 0, single buffered']
    #allocation12 [shape = 'u8[8192]{0}', space=vmem, size = 0x2000, scoped, tag = 'output window, operand 1, single buffered']
    #allocation13 [shape = 's32[1]{0}', space=sflag, size = 0x4, scoped, tag = 'scoped memory for tpu_custom_call.1']
    %14 = vsyncpa [#allocation3], 0
    %15 = vsyncpa [#allocation6], 0
    %16 = vsyncpa [#allocation9], 0
    %17 = vsyncpa [#allocation4], 0
    %18 = vsyncpa [#allocation13], 0
    // Predicated region
    $region2: #{tpu_custom_call.1} parent=1 // pred_check
      _
    $region3: #{tpu_custom_call.1} parent=1 // pred_check_branch
      %20 = sbr.rel (0) target = $region5
    $region4: #{tpu_custom_call.1} parent=1 // pred_region
      %22 = vsyncadd [#allocation3], 64
      %s23 = sshll.u32 %s0, 4
      %s24 = int_to_ptr.hbm [resolvable:$true] %s23
      %s25 = sshll.u32 [#allocation2], 4
      %s26 = int_to_ptr.vmem [resolvable:$true] %s25
      %31 = dma.hbm_to_vmem [thread:$0]  %s24, 64, %s26, [#allocation3], 64, 64, 4
    $region5: #{tpu_custom_call.1} parent=1 // pred_fallthru
      _
    // Predicated region
    $region6: #{tpu_custom_call.1} parent=1 // pred_check
      _
    $region7: #{tpu_custom_call.1} parent=1 // pred_check_branch
      %33 = sbr.rel (0) target = $region9
    $region8: #{tpu_custom_call.1} parent=1 // pred_region
      %35 = vsyncadd [#allocation6], 0
      %s36 = sshll.u32 %s1, 4
      %s37 = int_to_ptr.hbm [resolvable:$true] %s36
      %s38 = sshll.u32 [#allocation5], 4
      %s39 = int_to_ptr.vmem [resolvable:$true] %s38
      %44 = dma.hbm_to_vmem [thread:$0]  %s37, 128, %s39, [#allocation6], 64, 64, 4
    $region9: #{tpu_custom_call.1} parent=1 // pred_fallthru
      _
    // Predicated region
    $region10: #{tpu_custom_call.1} parent=1 // pred_check
      _
    $region11: #{tpu_custom_call.1} parent=1 // pred_check_branch
      %46 = sbr.rel (0) target = $region13
    $region12: #{tpu_custom_call.1} parent=1 // pred_region
      _
    $region13: #{tpu_custom_call.1} parent=1 // pred_fallthru
      _
    // Predicated region
    $region14: #{tpu_custom_call.1} parent=1 // pred_check
      _
    $region15: #{tpu_custom_call.1} parent=1 // pred_check_branch
      %48 = sbr.rel (0) target = $region17
    $region16: #{tpu_custom_call.1} parent=1 // pred_region
      %50 = vsyncadd [#allocation6], 0
      %s51 = sshll.u32 %s3, 4
      %s52 = int_to_ptr.hbm [resolvable:$true] %s51
      %s53 = sshll.u32 [#allocation7], 4
      %s54 = int_to_ptr.vmem [resolvable:$true] %s53
      %59 = dma.hbm_to_vmem [thread:$0]  %s52, 1024, %s54, [#allocation6], 64, 64, 4
    $region17: #{tpu_custom_call.1} parent=1 // pred_fallthru
      _
    // Predicated region
    $region18: #{tpu_custom_call.1} parent=1 // pred_check
      _
    $region19: #{tpu_custom_call.1} parent=1 // pred_check_branch
      %61 = sbr.rel (0) target = $region21
    $region20: #{tpu_custom_call.1} parent=1 // pred_region
      %63 = vsyncadd [#allocation9], 0
      %s65 = sshll.u32 %s4, 4
      %s66 = int_to_ptr.hbm [resolvable:$true] %s65
      %s67 = sshll.u32 [#allocation8], 4
      %s68 = int_to_ptr.vmem [resolvable:$true] %s67
      %70 = dma.hbm_to_vmem [thread:$0]  %s66, 16, %s68, [#allocation9]
    $region21: #{tpu_custom_call.1} parent=1 // pred_fallthru
      _
    // Predicated region
    $region22: #{tpu_custom_call.1} parent=1 // pred_check
      _
    $region23: #{tpu_custom_call.1} parent=1 // pred_check_branch
      %72 = sbr.rel (0) target = $region25
    $region24: #{tpu_custom_call.1} parent=1 // pred_region
      %74 = vsyncadd [#allocation9], 0
      %s75 = sshll.u32 %s5, 4
      %s76 = int_to_ptr.hbm [resolvable:$true] %s75
      %s77 = sshll.u32 [#allocation10], 4
      %s78 = int_to_ptr.vmem [resolvable:$true] %s77
      %83 = dma.hbm_to_vmem [thread:$0]  %s76, 2048, %s78, [#allocation9], 128, 128, 8
    $region25: #{tpu_custom_call.1} parent=1 // pred_fallthru
      _
    // Predicated region
    $region26: #{tpu_custom_call.1} parent=1 // pred_check
      _
    $region27: #{tpu_custom_call.1} parent=1 // pred_check_branch
      %85 = sbr.rel (0) target = $region29
    $region28: #{tpu_custom_call.1} parent=1 // pred_region
      _
    $region29: #{tpu_custom_call.1} parent=1 // pred_fallthru
      _
    // Predicated region
    $region30: #{tpu_custom_call.1} parent=1 // pred_check
      _
    $region31: #{tpu_custom_call.1} parent=1 // pred_check_branch
      %87 = sbr.rel (0) target = $region33
    $region32: #{tpu_custom_call.1} parent=1 // pred_region
      %89 = dma.done [#allocation3], 128
    $region33: #{tpu_custom_call.1} parent=1 // pred_fallthru
      _
    // Predicated region
    $region34: #{tpu_custom_call.1} parent=1 // pred_check
      _
    $region35: #{tpu_custom_call.1} parent=1 // pred_check_branch
      %91 = sbr.rel (0) target = $region37
    $region36: #{tpu_custom_call.1} parent=1 // pred_region
      %93 = dma.done [#allocation6], 128
    $region37: #{tpu_custom_call.1} parent=1 // pred_fallthru
      _
    // Predicated region
    $region38: #{tpu_custom_call.1} parent=1 // pred_check
      _
    $region39: #{tpu_custom_call.1} parent=1 // pred_check_branch
      %95 = sbr.rel (0) target = $region41
    $region40: #{tpu_custom_call.1} parent=1 // pred_region
      %97 = dma.done [#allocation6], 1024
    $region41: #{tpu_custom_call.1} parent=1 // pred_fallthru
      _
    // Predicated region
    $region42: #{tpu_custom_call.1} parent=1 // pred_check
      _
    $region43: #{tpu_custom_call.1} parent=1 // pred_check_branch
      %99 = sbr.rel (0) target = $region45
    $region44: #{tpu_custom_call.1} parent=1 // pred_region
      %101 = dma.done [#allocation9], 16
    $region45: #{tpu_custom_call.1} parent=1 // pred_fallthru
      _
    // Predicated region
    $region46: #{tpu_custom_call.1} parent=1 // pred_check
      _
    $region47: #{tpu_custom_call.1} parent=1 // pred_check_branch
      %103 = sbr.rel (0) target = $region49
    $region48: #{tpu_custom_call.1} parent=1 // pred_region
      %105 = dma.done [#allocation9], 2048
    $region49: #{tpu_custom_call.1} parent=1 // pred_fallthru
      _
    %v107 = vld [vmem:[#allocation2] sm:$0xf]
    %v108 = vld [vmem:[#allocation2 + $0x4] sm:$0xf]
    %v109 = vld [vmem:[#allocation5] sm:$0xf]
    %v110 = vld [vmem:[#allocation5 + $0x4] sm:$0xf]
    %v111 = vld [vmem:[%s2] sm:$0x1]
    %v113 = vperm.slane %v111, 0
    %v117 = vunpack.c.l.b16 %v107
    %v118 = vunpack.c.l.b16 %v108
    %v119 = vpack.c.b16 %v118, %v117
    %v122 = vunpack.c.l.b16 %v109
    %v123 = vunpack.c.l.b16 %v110
    %v124 = vpack.c.b16 %v123, %v122
    %vm126 = vcmask 130048
    %v128 = vsel %vm126, %v119, 0
    %130 = vmatpush.bf16.msra.mxu0 0
    %131 = vmatpush.bf16.msra.mxu0 0
    %132 = vmatpush.bf16.msra.mxu0 0
    %133 = vmatpush.bf16.msra.mxu0 0
    %134 = vmatpush.bf16.msra.mxu0 0
    %135 = vmatpush.bf16.msra.mxu0 0
    %136 = vmatpush.bf16.msra.mxu0 0
    %137 = vmatpush.bf16.msra.mxu0 %v124
    %138 = vmatmul.bf16.gmra.mxu0 %v128
    %v139 = vpop.f32.mrf.mxu0
    %v140 = vadd.f32 %v113, %v139
    %v141 = vpop.f32.mrf.mxu0
    %v142 = vadd.f32 %v113, %v141
    %143 = vdwg.mxu0
    %vm144 = vcmp.gt.f32.partialorder %v140, 0.0
    %vm145 = vcmp.gt.f32.partialorder %v142, 0.0
    %v146 = vmul.f32 %v140, 0.01
    %v147 = vmul.f32 %v142, 0.01
    %v148 = vsel %vm144, %v140, %v146
    %v149 = vsel %vm145, %v142, %v147
    %v150 = vpack.c.bf16 %v149, %v148
    %v151 = vld [vmem:[#allocation7] sm:$0xf]
    %v152 = vld [vmem:[#allocation7 + $0x4] sm:$0xf]
    %v153 = vld [vmem:[#allocation7 + $0x8] sm:$0xf]
    %v154 = vld [vmem:[#allocation7 + $0xc] sm:$0xf]
    %v155 = vld [vmem:[#allocation7 + $0x10] sm:$0xf]
    %v156 = vld [vmem:[#allocation7 + $0x14] sm:$0xf]
    %v157 = vld [vmem:[#allocation7 + $0x18] sm:$0xf]
    %v158 = vld [vmem:[#allocation7 + $0x1c] sm:$0xf]
    %v159 = vld [vmem:[#allocation7 + $0x20] sm:$0xf]
    %v160 = vld [vmem:[#allocation7 + $0x24] sm:$0xf]
    %v161 = vld [vmem:[#allocation7 + $0x28] sm:$0xf]
    %v162 = vld [vmem:[#allocation7 + $0x2c] sm:$0xf]
    %v163 = vld [vmem:[#allocation7 + $0x30] sm:$0xf]
    %v164 = vld [vmem:[#allocation7 + $0x34] sm:$0xf]
    %v165 = vld [vmem:[#allocation7 + $0x38] sm:$0xf]
    %v166 = vld [vmem:[#allocation7 + $0x3c] sm:$0xf]
    %v167 = vld [vmem:[#allocation8] sm:$0x1]
    %v169 = vperm.slane %v167, 0
    %v187 = vunpack.c.l.b16 %v151
    %v188 = vunpack.c.l.b16 %v152
    %v189 = vunpack.c.l.b16 %v153
    %v190 = vunpack.c.l.b16 %v154
    %v191 = vunpack.c.l.b16 %v155
    %v192 = vunpack.c.l.b16 %v156
    %v193 = vunpack.c.l.b16 %v157
    %v194 = vunpack.c.l.b16 %v158
    %v195 = vunpack.c.l.b16 %v159
    %v196 = vunpack.c.l.b16 %v160
    %v197 = vunpack.c.l.b16 %v161
    %v198 = vunpack.c.l.b16 %v162
    %v199 = vunpack.c.l.b16 %v163
    %v200 = vunpack.c.l.b16 %v164
    %v201 = vunpack.c.l.b16 %v165
    %v202 = vunpack.c.l.b16 %v166
    %v203 = vpack.c.b16 %v188, %v187
    %v204 = vpack.c.b16 %v190, %v189
    %v205 = vpack.c.b16 %v192, %v191
    %v206 = vpack.c.b16 %v194, %v193
    %v207 = vpack.c.b16 %v196, %v195
    %v208 = vpack.c.b16 %v198, %v197
    %v209 = vpack.c.b16 %v200, %v199
    %v210 = vpack.c.b16 %v202, %v201
    %219 = vmatpush.bf16.msra.mxu0 %v210
    %220 = vmatpush.bf16.msra.mxu0 %v209
    %221 = vmatpush.bf16.msra.mxu0 %v208
    %222 = vmatpush.bf16.msra.mxu0 %v207
    %223 = vmatpush.bf16.msra.mxu0 %v206
    %224 = vmatpush.bf16.msra.mxu0 %v205
    %225 = vmatpush.bf16.msra.mxu0 %v204
    %226 = vmatpush.bf16.msra.mxu0 %v203
    %227 = vmatmul.bf16.gmra.mxu0 %v150
    %v228 = vpop.f32.mrf.mxu0
    %v229 = vadd.f32 %v169, %v228
    %v230 = vpop.f32.mrf.mxu0
    %v231 = vadd.f32 %v169, %v230
    %232 = vdwg.mxu0
    %vm233 = vcmp.gt.f32.partialorder %v229, 0.0
    %vm234 = vcmp.gt.f32.partialorder %v231, 0.0
    %v235 = vmul.f32 %v229, 0.01
    %v236 = vmul.f32 %v231, 0.01
    %v237 = vsel %vm233, %v229, %v235
    %v238 = vsel %vm234, %v231, %v236
    %v239 = vpack.c.bf16 %v238, %v237
    %v240 = vld [vmem:[#allocation10] sm:$0xff]
    %v241 = vld [vmem:[#allocation10 + $0x8] sm:$0xff]
    %v242 = vld [vmem:[#allocation10 + $0x10] sm:$0xff]
    %v243 = vld [vmem:[#allocation10 + $0x18] sm:$0xff]
    %v244 = vld [vmem:[#allocation10 + $0x20] sm:$0xff]
    %v245 = vld [vmem:[#allocation10 + $0x28] sm:$0xff]
    %v246 = vld [vmem:[#allocation10 + $0x30] sm:$0xff]
    %v247 = vld [vmem:[#allocation10 + $0x38] sm:$0xff]
    %v248 = vld [vmem:[#allocation10 + $0x40] sm:$0xff]
    %v249 = vld [vmem:[#allocation10 + $0x48] sm:$0xff]
    %v250 = vld [vmem:[#allocation10 + $0x50] sm:$0xff]
    %v251 = vld [vmem:[#allocation10 + $0x58] sm:$0xff]
    %v252 = vld [vmem:[#allocation10 + $0x60] sm:$0xff]
    %v253 = vld [vmem:[#allocation10 + $0x68] sm:$0xff]
    %v254 = vld [vmem:[#allocation10 + $0x70] sm:$0xff]
    %v255 = vld [vmem:[#allocation10 + $0x78] sm:$0xff]
    %v256 = vld [vmem:[%s6] sm:$0x3]
    %v258 = vperm.slane %v256, 0
    %v259 = vperm.slane %v256, 1
    %v278 = vunpack.c.l.b16 %v240
    %v279 = vunpack.c.h.b16 %v240
    %v280 = vunpack.c.l.b16 %v241
    %v281 = vunpack.c.h.b16 %v241
    %v282 = vunpack.c.l.b16 %v242
    %v283 = vunpack.c.h.b16 %v242
    %v284 = vunpack.c.l.b16 %v243
    %v285 = vunpack.c.h.b16 %v243
    %v286 = vunpack.c.l.b16 %v244
    %v287 = vunpack.c.h.b16 %v244
    %v288 = vunpack.c.l.b16 %v245
    %v289 = vunpack.c.h.b16 %v245
    %v290 = vunpack.c.l.b16 %v246
    %v291 = vunpack.c.h.b16 %v246
    %v292 = vunpack.c.l.b16 %v247
    %v293 = vunpack.c.h.b16 %v247
    %v294 = vunpack.c.l.b16 %v248
    %v295 = vunpack.c.h.b16 %v248
    %v296 = vunpack.c.l.b16 %v249
    %v297 = vunpack.c.h.b16 %v249
    %v298 = vunpack.c.l.b16 %v250
    %v299 = vunpack.c.h.b16 %v250
    %v300 = vunpack.c.l.b16 %v251
    %v301 = vunpack.c.h.b16 %v251
    %v302 = vunpack.c.l.b16 %v252
    %v303 = vunpack.c.h.b16 %v252
    %v304 = vunpack.c.l.b16 %v253
    %v305 = vunpack.c.h.b16 %v253
    %v306 = vunpack.c.l.b16 %v254
    %v307 = vunpack.c.h.b16 %v254
    %v308 = vunpack.c.l.b16 %v255
    %v309 = vunpack.c.h.b16 %v255
    %v310 = vpack.c.b16 %v280, %v278
    %v311 = vpack.c.b16 %v281, %v279
    %v312 = vpack.c.b16 %v284, %v282
    %v313 = vpack.c.b16 %v285, %v283
    %v314 = vpack.c.b16 %v288, %v286
    %v315 = vpack.c.b16 %v289, %v287
    %v316 = vpack.c.b16 %v292, %v290
    %v317 = vpack.c.b16 %v293, %v291
    %v318 = vpack.c.b16 %v296, %v294
    %v319 = vpack.c.b16 %v297, %v295
    %v320 = vpack.c.b16 %v300, %v298
    %v321 = vpack.c.b16 %v301, %v299
    %v322 = vpack.c.b16 %v304, %v302
    %v323 = vpack.c.b16 %v305, %v303
    %v324 = vpack.c.b16 %v308, %v306
    %v325 = vpack.c.b16 %v309, %v307
    %342 = vmatpush.bf16.msra.mxu0 %v324
    %343 = vmatpush.bf16.msra.mxu0 %v322
    %344 = vmatpush.bf16.msra.mxu0 %v320
    %345 = vmatpush.bf16.msra.mxu0 %v318
    %346 = vmatpush.bf16.msra.mxu0 %v316
    %347 = vmatpush.bf16.msra.mxu0 %v314
    %348 = vmatpush.bf16.msra.mxu0 %v312
    %349 = vmatpush.bf16.msra.mxu0 %v310
    %350 = vmatmul.bf16.gmra.mxu0 %v239
    %v351 = vpop.f32.mrf.mxu0
    %v352 = vadd.f32 %v258, %v351
    %v353 = vpop.f32.mrf.mxu0
    %v354 = vadd.f32 %v258, %v353
    %355 = vdwg.mxu0
    %356 = vmatpush.bf16.msra.mxu0 %v325
    %357 = vmatpush.bf16.msra.mxu0 %v323
    %358 = vmatpush.bf16.msra.mxu0 %v321
    %359 = vmatpush.bf16.msra.mxu0 %v319
    %360 = vmatpush.bf16.msra.mxu0 %v317
    %361 = vmatpush.bf16.msra.mxu0 %v315
    %362 = vmatpush.bf16.msra.mxu0 %v313
    %363 = vmatpush.bf16.msra.mxu0 %v311
    %364 = vmatmul.bf16.gmra.mxu0 %v239
    %v365 = vpop.f32.mrf.mxu0
    %v366 = vadd.f32 %v259, %v365
    %v367 = vpop.f32.mrf.mxu0
    %v368 = vadd.f32 %v259, %v367
    %369 = vdwg.mxu0
    %370 = vst [vmem:[#allocation11] sm:$0xff] %v352
    %371 = vst [vmem:[#allocation11 + $0x8] sm:$0xff] %v354
    %v372 = vmax.f32 %v366, -20.0
    %v373 = vmax.f32 %v368, -20.0
    %v374 = vmin.f32 %v372, 2.0
    %v375 = vmin.f32 %v373, 2.0
    %v376 = vmul.f32 %v374, 1.442695
    %v377 = vpow.pop %v376
    %v378 = vmul.f32 %v375, 1.442695
    %v379 = vpow.pop %v378
    %380 = vst [vmem:[#allocation12] sm:$0xff] %v377
    %381 = vst [vmem:[#allocation12 + $0x8] sm:$0xff] %v379
    // Predicated region
    $region50: #{tpu_custom_call.1} parent=1 // pred_check
      _
    $region51: #{tpu_custom_call.1} parent=1 // pred_check_branch
      %383 = sbr.rel (0) target = $region53
    $region52: #{tpu_custom_call.1} parent=1 // pred_region
      %385 = vsyncadd [#allocation4], 128
      %s386 = sshll.u32 [#allocation11], 4
      %s387 = int_to_ptr.vmem [resolvable:$true] %s386
      %s388 = sshll.u32 %s7, 4
      %s389 = int_to_ptr.hbm [resolvable:$true] %s388
      %394 = dma.vmem_to_hbm [thread:$0]  %s387, 128, %s389, [#allocation4], 128, 128, 8
    $region53: #{tpu_custom_call.1} parent=1 // pred_fallthru
      _
    // Predicated region
    $region54: #{tpu_custom_call.1} parent=1 // pred_check
      _
    $region55: #{tpu_custom_call.1} parent=1 // pred_check_branch
      %396 = sbr.rel (0) target = $region57
    $region56: #{tpu_custom_call.1} parent=1 // pred_region
      %398 = vsyncadd [#allocation13], 128
      %s399 = sshll.u32 [#allocation12], 4
      %s400 = int_to_ptr.vmem [resolvable:$true] %s399
      %s401 = sshll.u32 %s8, 4
      %s402 = int_to_ptr.hbm [resolvable:$true] %s401
      %407 = dma.vmem_to_hbm [thread:$0]  %s400, 128, %s402, [#allocation13], 128, 128, 8
    $region57: #{tpu_custom_call.1} parent=1 // pred_fallthru
      _
    // Predicated region
    $region58: #{tpu_custom_call.1} parent=1 // pred_check
      _
    $region59: #{tpu_custom_call.1} parent=1 // pred_check_branch
      %409 = sbr.rel (0) target = $region61
    $region60: #{tpu_custom_call.1} parent=1 // pred_region
      %411 = dma.done [#allocation4], 256
    $region61: #{tpu_custom_call.1} parent=1 // pred_fallthru
      _
    // Predicated region
    $region62: #{tpu_custom_call.1} parent=1 // pred_check
      _
    $region63: #{tpu_custom_call.1} parent=1 // pred_check_branch
      %413 = sbr.rel (0) target = $region65
    $region64: #{tpu_custom_call.1} parent=1 // pred_region
      %415 = dma.done [#allocation13], 256
    $region65: #{tpu_custom_call.1} parent=1 // pred_fallthru
      _
    %416 = vsyncpa [#allocation3], 1
    %417 = vsyncpa [#allocation6], 1
    %418 = vsyncpa [#allocation9], 1
    %419 = vsyncpa [#allocation4], 1
    %420 = vsyncpa [#allocation13], 1

</llo_original>
